<compile_context>
chip_gen: v7x
topology: tpu7x:2x2x1
jax: 0.10.0
libtpu: 0.0.40
codegen_flags: <defaults>
</compile_context>

<pallas_src>
import math

import jax
import jax.numpy as jnp
from jax import lax
from jax.experimental import pallas as pl
from jax.experimental.pallas import tpu as pltpu

LN_EPS = 1e-12
VMEM_LIMIT = 64 * 1024 * 1024  # fits every generation (v7x has 64 MiB physical)


def _round_up(a, b):
    return (a + b - 1) // b * b


def _erf(x):
    # Abramowitz & Stegun 7.1.26 polynomial erf (|abs err| < 1.5e-7), built only
    # from ops guaranteed to lower in Mosaic (abs, mul, add, div, exp).
    # TODO(synk): switch to lax.erf once Mosaic erf lowering is confirmed everywhere.
    p = 0.3275911
    a1, a2, a3, a4, a5 = (0.254829592, -0.284496736, 1.421413741,
                          -1.453152027, 1.061405429)
    sign = jnp.where(x >= 0.0, 1.0, -1.0)
    ax = jnp.abs(x)
    t = 1.0 / (1.0 + p * ax)
    poly = ((((a5 * t + a4) * t + a3) * t + a2) * t + a1) * t
    return sign * (1.0 - poly * jnp.exp(-ax * ax))


def _gelu_exact(x):
    # x * 0.5 * (1 + erf(x / sqrt(2))) -- BERT's erf-based gelu.
    return x * 0.5 * (1.0 + _erf(x * (1.0 / math.sqrt(2.0))))


# ------------------------- kernel 1: transform ------------------------------
def transform_kernel(x_ref, wd_ref, bd_ref, g_ref, b_ref, h_ref):
    # dense -> gelu -> LayerNorm, all math in fp32; store in MXU operand dtype.
    h = jnp.dot(x_ref[...].astype(jnp.float32), wd_ref[...],
                preferred_element_type=jnp.float32)
    h = h + bd_ref[...]
    h = _gelu_exact(h)
    mean = jnp.mean(h, axis=-1, keepdims=True)
    var = jnp.mean(jnp.square(h - mean), axis=-1, keepdims=True)
    h = (h - mean) * lax.rsqrt(var + LN_EPS)
    h_ref[...] = (h * g_ref[...] + b_ref[...]).astype(h_ref.dtype)


# ------------------------- kernel 2: decoder --------------------------------
def decoder_kernel(h_ref, w_ref, bias_ref, out_ref):
    # (TT, H) @ (TV, H)^T on the MXU, fp32 accumulation; lane-dense (TT, TV) store.
    acc = lax.dot_general(h_ref[...], w_ref[...],
                          dimension_numbers=(((1,), (1,)), ((), ())),
                          preferred_element_type=jnp.float32)
    out_ref[...] = (acc + bias_ref[...]).astype(out_ref.dtype)


def bert_lm_prediction_head(x, dense_w, dense_b, ln_gamma, ln_beta, emb_w, dec_bias,
                            *, token_tile=None, vocab_tile=None, mxu_dtype=None):
    """Pallas forward of BertLMPredictionHead.

    x:        (B, S, H)  hidden states.
    dense_w:  (H, H)     transform dense weight (PyTorch (out, in) layout).
    dense_b:  (H,)       transform dense bias.
    ln_gamma: (H,)       LayerNorm weight.     ln_beta: (H,) LayerNorm bias.
    emb_w:    (V, H)     tied embedding weights (decoder weight, PyTorch layout).
    dec_bias: (V,)       decoder bias.
    Returns:  (B, S, V)  prediction scores in x.dtype.
    """
    B, S, H = x.shape
    V = emb_w.shape[0]
    T = B * S

    if mxu_dtype is None:
        # bf16 MXU operands when the model already runs in low precision; keep the
        # input dtype otherwise so numerics match the fp32 reference exactly.
        mxu_dtype = jnp.bfloat16 if x.dtype in (jnp.bfloat16, jnp.float16) else x.dtype

    # ---- tile selection -----------------------------------------------------
    if token_tile is None:
        cap = 1024 if mxu_dtype == jnp.bfloat16 else 512
        token_tile = min(cap, _round_up(T, 8))
    TT = token_tile
    assert TT % 8 == 0, "token tile must be a multiple of 8"
    Tp = _round_up(T, TT)

    if vocab_tile is None:
        vocab_tile = None
        for cand in (2048, 1024, 512, 256, 128):
            if _round_up(V, cand) // cand >= 2:   # want >=2 pipelined vocab steps
                vocab_tile = cand
                break
        if vocab_tile is None:                    # tiny vocab: single lane-dense tile
            vocab_tile = _round_up(V, 128)
    TV = vocab_tile
    assert TV % 128 == 0, "vocab tile must be a multiple of 128"
    Vp = _round_up(V, TV)

    # ---- wrapper-side layout (small / one-pass; no fp32 transpose of emb_w) ----
    x2 = x.reshape(T, H)
    if Tp != T:
        x2 = jnp.pad(x2, ((0, Tp - T), (0, 0)))
    wd = jnp.transpose(dense_w).astype(jnp.float32)      # (H_in, H_out), small
    bd = dense_b.reshape(1, H).astype(jnp.float32)
    g = ln_gamma.reshape(1, H).astype(jnp.float32)
    b = ln_beta.reshape(1, H).astype(jnp.float32)

    w_dec = emb_w                                        # stays (V, H): no transpose
    if Vp != V:
        w_dec = jnp.pad(w_dec, ((0, Vp - V), (0, 0)))
    if w_dec.dtype != mxu_dtype:
        # TODO(synk): cast/pad the tied embedding once at model init, outside the hot path.
        w_dec = w_dec.astype(mxu_dtype)
    bias = dec_bias
    if Vp != V:
        bias = jnp.pad(bias, (0, Vp - V))
    bias = bias.reshape(1, Vp).astype(jnp.float32)

    # ---- kernel 1: transform (dense + gelu + LayerNorm) ---------------------
    h = pl.pallas_call(
        transform_kernel,
        grid=(Tp // TT,),
        in_specs=[
            pl.BlockSpec((TT, H), lambda i: (i, 0)),
            pl.BlockSpec((H, H), lambda i: (0, 0)),
            pl.BlockSpec((1, H), lambda i: (0, 0)),
            pl.BlockSpec((1, H), lambda i: (0, 0)),
            pl.BlockSpec((1, H), lambda i: (0, 0)),
        ],
        out_specs=pl.BlockSpec((TT, H), lambda i: (i, 0)),
        out_shape=jax.ShapeDtypeStruct((Tp, H), mxu_dtype),
        compiler_params=pltpu.CompilerParams(
            dimension_semantics=("parallel",),
            vmem_limit_bytes=VMEM_LIMIT,
        ),
    )(x2, wd, bd, g, b)

    # ---- kernel 2: decoder (streamed tied-embedding matmul + bias) ----------
    out = pl.pallas_call(
        decoder_kernel,
        grid=(Tp // TT, Vp // TV),
        in_specs=[
            pl.BlockSpec((TT, H), lambda i, j: (i, 0)),   # activations (reused over j)
            pl.BlockSpec((TV, H), lambda i, j: (j, 0)),   # embedding slab (pipelined)
            pl.BlockSpec((1, TV), lambda i, j: (0, j)),   # decoder bias slab
        ],
        out_specs=pl.BlockSpec((TT, TV), lambda i, j: (i, j)),
        out_shape=jax.ShapeDtypeStruct((Tp, Vp), x.dtype),
        compiler_params=pltpu.CompilerParams(
            dimension_semantics=("parallel", "parallel"),
            vmem_limit_bytes=VMEM_LIMIT,
        ),
    )(h, w_dec, bias)

    return out[:T, :V].reshape(B, S, V)


# ---------------- pure-JAX reference (mirrors the PyTorch semantics) ----------------
def bert_lm_prediction_head_reference(x, dense_w, dense_b, ln_gamma, ln_beta,
                                      emb_w, dec_bias):
    B, S, H = x.shape
    h = x.reshape(-1, H).astype(jnp.float32) @ dense_w.T.astype(jnp.float32) + dense_b
    h = h * 0.5 * (1.0 + lax.erf(h / jnp.sqrt(2.0)))           # exact erf gelu
    mean = jnp.mean(h, axis=-1, keepdims=True)
    var = jnp.mean(jnp.square(h - mean), axis=-1, keepdims=True)
    h = (h - mean) / jnp.sqrt(var + LN_EPS)
    h = h * ln_gamma + ln_beta
    logits = h @ emb_w.T.astype(jnp.float32) + dec_bias
    return logits.reshape(B, S, -1)


if __name__ == "__main__":
    # Small deterministic setup consistent with the module: B=2, S=8, hidden=32, vocab=512.
    B, S, H, V = 2, 8, 32, 512
    key = jax.random.PRNGKey(0)
    ks = jax.random.split(key, 7)
    sc = 0.05
    x = jax.random.normal(ks[0], (B, S, H), jnp.float32)
    dense_w = jax.random.normal(ks[1], (H, H), jnp.float32) * sc
    dense_b = jax.random.normal(ks[2], (H,), jnp.float32) * sc
    ln_gamma = 1.0 + jax.random.normal(ks[3], (H,), jnp.float32) * sc
    ln_beta = jax.random.normal(ks[4], (H,), jnp.float32) * sc
    emb_w = jax.random.normal(ks[5], (V, H), jnp.float32) * sc   # tied embedding weights
    dec_bias = jax.random.normal(ks[6], (V,), jnp.float32) * sc

    ref = bert_lm_prediction_head_reference(x, dense_w, dense_b, ln_gamma, ln_beta,
                                            emb_w, dec_bias)

    # fp32 path: must match the reference tightly.
    out = bert_lm_prediction_head(x, dense_w, dense_b, ln_gamma, ln_beta, emb_w, dec_bias)
    out = jax.block_until_ready(out)
    assert out.shape == (B, S, V)
    max_err = float(jnp.max(jnp.abs(out - ref)))
    assert jnp.allclose(out, ref, atol=1e-4, rtol=1e-4), max_err

    # bf16 fast path (production config: bf16 MXU operands, fp32 accumulation,
    # bf16 logits): check it compiles/runs and is close at bf16 precision.
    out_bf16 = bert_lm_prediction_head(
        x.astype(jnp.bfloat16), dense_w, dense_b, ln_gamma, ln_beta,
        emb_w.astype(jnp.bfloat16), dec_bias)
    out_bf16 = jax.block_until_ready(out_bf16)
    assert out_bf16.shape == (B, S, V)
    assert out_bf16.dtype == jnp.bfloat16
    assert jnp.allclose(out_bf16.astype(jnp.float32), ref, atol=5e-2, rtol=5e-2), \
        float(jnp.max(jnp.abs(out_bf16.astype(jnp.float32) - ref)))

    print("KERNEL_OK")
</pallas_src>

<mosaic_0001>
module attributes {stable_mosaic.version = 11 : i64} {
  func.func @transform_kernel(%arg0: i32, %arg1: memref<16x32xf32, #tpu.memory_space<vmem>>, %arg2: memref<32x32xf32, #tpu.memory_space<vmem>>, %arg3: memref<1x32xf32, #tpu.memory_space<vmem>>, %arg4: memref<1x32xf32, #tpu.memory_space<vmem>>, %arg5: memref<1x32xf32, #tpu.memory_space<vmem>>, %arg6: memref<16x32xf32, #tpu.memory_space<vmem>>) attributes {dimension_semantics = [#tpu.dimension_semantics<parallel>], iteration_bounds = array<i64: 1>, scalar_prefetch = 0 : i64, scratch_operands = 0 : i64, tpu.core_type = #tpu.core_type<tc>, window_params = [{transform_indices = @transform_0, window_bounds = array<i64: 16, 32>}, {pipeline_mode = #tpu.pipeline_mode<synchronous>, transform_indices = @transform_1, window_bounds = array<i64: 32, 32>}, {pipeline_mode = #tpu.pipeline_mode<synchronous>, transform_indices = @transform_2, window_bounds = array<i64: 1, 32>}, {pipeline_mode = #tpu.pipeline_mode<synchronous>, transform_indices = @transform_3, window_bounds = array<i64: 1, 32>}, {pipeline_mode = #tpu.pipeline_mode<synchronous>, transform_indices = @transform_4, window_bounds = array<i64: 1, 32>}, {transform_indices = @transform_5, window_bounds = array<i64: 16, 32>}]} {
    %c0 = arith.constant 0 : index
    %c0_0 = arith.constant 0 : index
    %0 = vector.load %arg1[%c0, %c0_0] : memref<16x32xf32, #tpu.memory_space<vmem>>, vector<16x32xf32>
    %c0_1 = arith.constant 0 : index
    %c0_2 = arith.constant 0 : index
    %1 = vector.load %arg2[%c0_1, %c0_2] : memref<32x32xf32, #tpu.memory_space<vmem>>, vector<32x32xf32>
    %cst = arith.constant dense<0.000000e+00> : vector<16x32xf32>
    %2 = tpu.matmul %0, %1, %cst {dimension_numbers = #tpu.dot_dimension_numbers<[1], [0], [0], [1], [0, 0, 1, 1], [], []>} : vector<16x32xf32>, vector<32x32xf32>, vector<16x32xf32> -> vector<16x32xf32>
    %c0_3 = arith.constant 0 : index
    %c0_4 = arith.constant 0 : index
    %3 = vector.load %arg3[%c0_3, %c0_4] : memref<1x32xf32, #tpu.memory_space<vmem>>, vector<1x32xf32>
    %4 = vector.broadcast %3 : vector<1x32xf32> to vector<16x32xf32>
    %5 = arith.addf %2, %4 : vector<16x32xf32>
    %cst_5 = arith.constant 5.000000e-01 : f32
    %6 = vector.broadcast %cst_5 : f32 to vector<16x32xf32>
    %7 = arith.mulf %5, %6 : vector<16x32xf32>
    %cst_6 = arith.constant 0.707106769 : f32
    %8 = vector.broadcast %cst_6 : f32 to vector<16x32xf32>
    %9 = arith.mulf %5, %8 : vector<16x32xf32>
    %cst_7 = arith.constant 0.000000e+00 : f32
    %10 = vector.broadcast %cst_7 : f32 to vector<16x32xf32>
    %11 = arith.cmpf oge, %9, %10 : vector<16x32xf32>
    %cst_8 = arith.constant 1.000000e+00 : f32
    %cst_9 = arith.constant -1.000000e+00 : f32
    %12 = vector.broadcast %cst_8 : f32 to vector<16x32xf32>
    %13 = vector.broadcast %cst_9 : f32 to vector<16x32xf32>
    %14 = arith.select %11, %12, %13 : vector<16x32xi1>, vector<16x32xf32>
    %15 = math.absf %9 : vector<16x32xf32>
    %cst_10 = arith.constant 0.327591091 : f32
    %16 = vector.broadcast %cst_10 : f32 to vector<16x32xf32>
    %17 = arith.mulf %16, %15 : vector<16x32xf32>
    %cst_11 = arith.constant 1.000000e+00 : f32
    %18 = vector.broadcast %cst_11 : f32 to vector<16x32xf32>
    %19 = arith.addf %18, %17 : vector<16x32xf32>
    %cst_12 = arith.constant 1.000000e+00 : f32
    %20 = vector.broadcast %cst_12 : f32 to vector<16x32xf32>
    %21 = arith.divf %20, %19 : vector<16x32xf32>
    %cst_13 = arith.constant 1.06140542 : f32
    %22 = vector.broadcast %cst_13 : f32 to vector<16x32xf32>
    %23 = arith.mulf %22, %21 : vector<16x32xf32>
    %cst_14 = arith.constant -1.45315206 : f32
    %24 = vector.broadcast %cst_14 : f32 to vector<16x32xf32>
    %25 = arith.addf %23, %24 : vector<16x32xf32>
    %26 = arith.mulf %25, %21 : vector<16x32xf32>
    %cst_15 = arith.constant 1.42141378 : f32
    %27 = vector.broadcast %cst_15 : f32 to vector<16x32xf32>
    %28 = arith.addf %26, %27 : vector<16x32xf32>
    %29 = arith.mulf %28, %21 : vector<16x32xf32>
    %cst_16 = arith.constant -0.284496725 : f32
    %30 = vector.broadcast %cst_16 : f32 to vector<16x32xf32>
    %31 = arith.addf %29, %30 : vector<16x32xf32>
    %32 = arith.mulf %31, %21 : vector<16x32xf32>
    %cst_17 = arith.constant 0.254829586 : f32
    %33 = vector.broadcast %cst_17 : f32 to vector<16x32xf32>
    %34 = arith.addf %32, %33 : vector<16x32xf32>
    %35 = arith.mulf %34, %21 : vector<16x32xf32>
    %cst_18 = arith.constant 0.000000e+00 : f32
    %36 = vector.broadcast %cst_18 : f32 to vector<16x32xf32>
    %37 = arith.subf %36, %15 : vector<16x32xf32>
    %38 = arith.mulf %37, %15 : vector<16x32xf32>
    %39 = math.exp %38 : vector<16x32xf32>
    %40 = arith.mulf %35, %39 : vector<16x32xf32>
    %cst_19 = arith.constant 1.000000e+00 : f32
    %41 = vector.broadcast %cst_19 : f32 to vector<16x32xf32>
    %42 = arith.subf %41, %40 : vector<16x32xf32>
    %43 = arith.mulf %14, %42 : vector<16x32xf32>
    %cst_20 = arith.constant 1.000000e+00 : f32
    %44 = vector.broadcast %cst_20 : f32 to vector<16x32xf32>
    %45 = arith.addf %44, %43 : vector<16x32xf32>
    %46 = arith.mulf %7, %45 : vector<16x32xf32>
    %cst_21 = arith.constant dense<0.000000e+00> : vector<16xf32>
    %47 = vector.multi_reduction <add>, %46, %cst_21 [1] : vector<16x32xf32> to vector<16xf32>
    %48 = vector.shape_cast %47 : vector<16xf32> to vector<16x1xf32>
    %cst_22 = arith.constant 3.200000e+01 : f32
    %49 = vector.broadcast %cst_22 : f32 to vector<16x1xf32>
    %50 = arith.divf %48, %49 : vector<16x1xf32>
    %51 = vector.broadcast %50 : vector<16x1xf32> to vector<16x32xf32>
    %52 = arith.subf %46, %51 : vector<16x32xf32>
    %53 = arith.mulf %52, %52 : vector<16x32xf32>
    %cst_23 = arith.constant dense<0.000000e+00> : vector<16xf32>
    %54 = vector.multi_reduction <add>, %53, %cst_23 [1] : vector<16x32xf32> to vector<16xf32>
    %55 = vector.shape_cast %54 : vector<16xf32> to vector<16x1xf32>
    %cst_24 = arith.constant 3.200000e+01 : f32
    %56 = vector.broadcast %cst_24 : f32 to vector<16x1xf32>
    %57 = arith.divf %55, %56 : vector<16x1xf32>
    %58 = vector.broadcast %50 : vector<16x1xf32> to vector<16x32xf32>
    %59 = arith.subf %46, %58 : vector<16x32xf32>
    %cst_25 = arith.constant 9.99999996E-13 : f32
    %60 = vector.broadcast %cst_25 : f32 to vector<16x1xf32>
    %61 = arith.addf %57, %60 : vector<16x1xf32>
    %62 = math.rsqrt %61 : vector<16x1xf32>
    %63 = vector.broadcast %62 : vector<16x1xf32> to vector<16x32xf32>
    %64 = arith.mulf %59, %63 : vector<16x32xf32>
    %c0_26 = arith.constant 0 : index
    %c0_27 = arith.constant 0 : index
    %65 = vector.load %arg4[%c0_26, %c0_27] : memref<1x32xf32, #tpu.memory_space<vmem>>, vector<1x32xf32>
    %66 = vector.broadcast %65 : vector<1x32xf32> to vector<16x32xf32>
    %67 = arith.mulf %64, %66 : vector<16x32xf32>
    %c0_28 = arith.constant 0 : index
    %c0_29 = arith.constant 0 : index
    %68 = vector.load %arg5[%c0_28, %c0_29] : memref<1x32xf32, #tpu.memory_space<vmem>>, vector<1x32xf32>
    %69 = vector.broadcast %68 : vector<1x32xf32> to vector<16x32xf32>
    %70 = arith.addf %67, %69 : vector<16x32xf32>
    %c0_30 = arith.constant 0 : index
    %c0_31 = arith.constant 0 : index
    %71 = vector.load %arg6[%c0_30, %c0_31] : memref<16x32xf32, #tpu.memory_space<vmem>>, vector<16x32xf32>
    tpu.vector_store %arg6[%c0_30, %c0_31], %70 {strides = array<i32>} : memref<16x32xf32, #tpu.memory_space<vmem>>, vector<16x32xf32>,
    return
  }
  func.func @transform_0(%arg0: i32) -> (i32, i32) {
    %c0_i32 = arith.constant 0 : i32
    %c0_i32_0 = arith.constant 0 : i32
    return %arg0, %c0_i32 : i32, i32
  }
  func.func @transform_1(%arg0: i32) -> (i32, i32) {
    %c0_i32 = arith.constant 0 : i32
    %c0_i32_0 = arith.constant 0 : i32
    %c0_i32_1 = arith.constant 0 : i32
    return %c0_i32, %c0_i32_0 : i32, i32
  }
  func.func @transform_2(%arg0: i32) -> (i32, i32) {
    %c0_i32 = arith.constant 0 : i32
    %c0_i32_0 = arith.constant 0 : i32
    %c0_i32_1 = arith.constant 0 : i32
    return %c0_i32, %c0_i32_0 : i32, i32
  }
  func.func @transform_3(%arg0: i32) -> (i32, i32) {
    %c0_i32 = arith.constant 0 : i32
    %c0_i32_0 = arith.constant 0 : i32
    %c0_i32_1 = arith.constant 0 : i32
    return %c0_i32, %c0_i32_0 : i32, i32
  }
  func.func @transform_4(%arg0: i32) -> (i32, i32) {
    %c0_i32 = arith.constant 0 : i32
    %c0_i32_0 = arith.constant 0 : i32
    %c0_i32_1 = arith.constant 0 : i32
    return %c0_i32, %c0_i32_0 : i32, i32
  }
  func.func @transform_5(%arg0: i32) -> (i32, i32) {
    %c0_i32 = arith.constant 0 : i32
    %c0_i32_0 = arith.constant 0 : i32
    return %arg0, %c0_i32 : i32, i32
  }
}

</mosaic_0001>

<llo_original>
// kernel: tpu_custom_call.1
$region0: #{tpu_custom_call.1}
  #allocation0 [shape = 'u32[]', space=smem, size = 0x4, offset = 0x4, fixed_abs, tag = 'smem constant byte address 0x4 - core index']
  #allocation1 [shape = 'u32[144,128]{1,0:T(1,128)}', space=vmem, size = 0x12000, scoped, tag = 'internal scratch']
  %s0 = inlined_call_operand.hbm [shape: f32[16,32], index: 0, kind: input, shape index: {}]
  %s1 = inlined_call_operand.hbm [shape: f32[32,32], index: 1, kind: input, shape index: {}]
  %s2 = inlined_call_operand.hbm [shape: f32[1,32], index: 2, kind: input, shape index: {}]
  %s3 = inlined_call_operand.hbm [shape: f32[1,32], index: 3, kind: input, shape index: {}]
  %s4 = inlined_call_operand.hbm [shape: f32[1,32], index: 4, kind: input, shape index: {}]
  %s5 = inlined_call_operand.hbm [shape: f32[16,32], index: 5, kind: output, shape index: {}]
  %s6 = sld [smem:[#allocation0]]
  $region50: #{tpu_custom_call.1} parent=0
    _
  %s8 = ssub.s32 1, %s6
  %s9 = scalar_select 0, %s8, %s6
  $region1: #{tpu_custom_call.1} parent=0
    #allocation2 [shape = 'u8[8192]{0}', space=vmem, size = 0x2000, scoped, tag = 'input window, operand 0, single buffered']
    #allocation3 [shape = 's32[1]{0}', space=sflag, size = 0x4, scoped, tag = 'scoped memory for tpu_custom_call.1']
    #allocation4 [shape = 's32[1]{0}', space=sflag, size = 0x4, scoped, tag = 'scoped memory for tpu_custom_call.1']
    #allocation5 [shape = 'u8[16384]{0}', space=vmem, size = 0x4000, scoped, tag = 'input window, operand 1, single buffered']
    #allocation6 [shape = 's32[1]{0}', space=sflag, size = 0x4, scoped, tag = 'scoped memory for tpu_custom_call.1']
    #allocation7 [shape = 'u8[512]{0}', space=vmem, size = 0x400, scoped, tag = 'input window, operand 2, single buffered']
    #allocation8 [shape = 'u8[512]{0}', space=vmem, size = 0x400, scoped, tag = 'input window, operand 3, single buffered']
    #allocation9 [shape = 's32[1]{0}', space=sflag, size = 0x4, scoped, tag = 'scoped memory for tpu_custom_call.1']
    #allocation10 [shape = 'u8[512]{0}', space=vmem, size = 0x400, scoped, tag = 'input window, operand 4, single buffered']
    #allocation11 [shape = 'u8[8192]{0}', space=vmem, size = 0x2000, scoped, tag = 'output window, operand 0, single buffered']
    %10 = vsyncpa [#allocation3], 0
    %11 = vsyncpa [#allocation6], 0
    %12 = vsyncpa [#allocation9], 0
    %13 = vsyncpa [#allocation4], 0
    // Predicated region
    $region2: #{tpu_custom_call.1} parent=1 // pred_check
      _
    $region3: #{tpu_custom_call.1} parent=1 // pred_check_branch
      %15 = sbr.rel (0) target = $region5
    $region4: #{tpu_custom_call.1} parent=1 // pred_region
      %s17 = ssub.s32 256, 256
      %18 = vsyncadd [#allocation3], %s17
      %s19 = sshll.u32 [#allocation2], 4
      %s20 = int_to_ptr.vmem [resolvable:$true] %s19
      %25 = dma.hbm_to_vmem [thread:$0]  %s0, 256, %s20, [#allocation3], 128, 128, 8
    $region5: #{tpu_custom_call.1} parent=1 // pred_fallthru
      _
    // Predicated region
    $region6: #{tpu_custom_call.1} parent=1 // pred_check
      _
    $region7: #{tpu_custom_call.1} parent=1 // pred_check_branch
      %27 = sbr.rel (0) target = $region9
    $region8: #{tpu_custom_call.1} parent=1 // pred_region
      %s29 = ssub.s32 512, 512
      %30 = vsyncadd [#allocation6], %s29
      %s31 = sshll.u32 [#allocation5], 4
      %s32 = int_to_ptr.vmem [resolvable:$true] %s31
      %37 = dma.hbm_to_vmem [thread:$0]  %s1, 512, %s32, [#allocation6], 128, 128, 8
    $region9: #{tpu_custom_call.1} parent=1 // pred_fallthru
      _
    // Predicated region
    $region10: #{tpu_custom_call.1} parent=1 // pred_check
      _
    $region11: #{tpu_custom_call.1} parent=1 // pred_check_branch
      %39 = sbr.rel (0) target = $region13
    $region12: #{tpu_custom_call.1} parent=1 // pred_region
      %s41 = ssub.s32 16, 16
      %42 = vsyncadd [#allocation6], %s41
      %s44 = sshll.u32 [#allocation7], 4
      %s45 = int_to_ptr.vmem [resolvable:$true] %s44
      %47 = dma.hbm_to_vmem [thread:$0]  %s2, 16, %s45, [#allocation6]
    $region13: #{tpu_custom_call.1} parent=1 // pred_fallthru
      _
    // Predicated region
    $region14: #{tpu_custom_call.1} parent=1 // pred_check
      _
    $region15: #{tpu_custom_call.1} parent=1 // pred_check_branch
      %49 = sbr.rel (0) target = $region17
    $region16: #{tpu_custom_call.1} parent=1 // pred_region
      %s51 = ssub.s32 16, 16
      %52 = vsyncadd [#allocation9], %s51
      %s54 = sshll.u32 [#allocation8], 4
      %s55 = int_to_ptr.vmem [resolvable:$true] %s54
      %57 = dma.hbm_to_vmem [thread:$0]  %s3, 16, %s55, [#allocation9]
    $region17: #{tpu_custom_call.1} parent=1 // pred_fallthru
      _
    // Predicated region
    $region18: #{tpu_custom_call.1} parent=1 // pred_check
      _
    $region19: #{tpu_custom_call.1} parent=1 // pred_check_branch
      %59 = sbr.rel (0) target = $region21
    $region20: #{tpu_custom_call.1} parent=1 // pred_region
      %s61 = ssub.s32 16, 16
      %62 = vsyncadd [#allocation9], %s61
      %s64 = sshll.u32 [#allocation10], 4
      %s65 = int_to_ptr.vmem [resolvable:$true] %s64
      %67 = dma.hbm_to_vmem [thread:$0]  %s4, 16, %s65, [#allocation9]
    $region21: #{tpu_custom_call.1} parent=1 // pred_fallthru
      _
    // Predicated region
    $region22: #{tpu_custom_call.1} parent=1 // pred_check
      _
    $region23: #{tpu_custom_call.1} parent=1 // pred_check_branch
      %69 = sbr.rel (0) target = $region25
    $region24: #{tpu_custom_call.1} parent=1 // pred_region
      %70 = dma.done [#allocation3], 256
    $region25: #{tpu_custom_call.1} parent=1 // pred_fallthru
      _
    // Predicated region
    $region26: #{tpu_custom_call.1} parent=1 // pred_check
      _
    $region27: #{tpu_custom_call.1} parent=1 // pred_check_branch
      %72 = sbr.rel (0) target = $region29
    $region28: #{tpu_custom_call.1} parent=1 // pred_region
      %73 = dma.done [#allocation6], 512
    $region29: #{tpu_custom_call.1} parent=1 // pred_fallthru
      _
    // Predicated region
    $region30: #{tpu_custom_call.1} parent=1 // pred_check
      _
    $region31: #{tpu_custom_call.1} parent=1 // pred_check_branch
      %75 = sbr.rel (0) target = $region33
    $region32: #{tpu_custom_call.1} parent=1 // pred_region
      %76 = dma.done [#allocation6], 16
    $region33: #{tpu_custom_call.1} parent=1 // pred_fallthru
      _
    // Predicated region
    $region34: #{tpu_custom_call.1} parent=1 // pred_check
      _
    $region35: #{tpu_custom_call.1} parent=1 // pred_check_branch
      %78 = sbr.rel (0) target = $region37
    $region36: #{tpu_custom_call.1} parent=1 // pred_region
      %79 = dma.done [#allocation9], 16
    $region37: #{tpu_custom_call.1} parent=1 // pred_fallthru
      _
    // Predicated region
    $region38: #{tpu_custom_call.1} parent=1 // pred_check
      _
    $region39: #{tpu_custom_call.1} parent=1 // pred_check_branch
      %81 = sbr.rel (0) target = $region41
    $region40: #{tpu_custom_call.1} parent=1 // pred_region
      %82 = dma.done [#allocation9], 16
    $region41: #{tpu_custom_call.1} parent=1 // pred_fallthru
      _
    %v83 = vld [vmem:[#allocation2] sm:$0xff]
    %v84 = vld [vmem:[#allocation2 + $0x8] sm:$0xff]
    %v85 = vld [vmem:[#allocation5] sm:$0xff]
    %v86 = vld [vmem:[#allocation5 + $0x8] sm:$0xff]
    %v87 = vld [vmem:[#allocation5 + $0x10] sm:$0xff]
    %v88 = vld [vmem:[#allocation5 + $0x18] sm:$0xff]
    %v89 = vld [vmem:[#allocation7] sm:$0x1]
    %v91 = vlaneseq
    %v92 = vshrl.u32 %v91, 7
    %v93 = vsub.s32 0, %v92
    %v94 = vrot.slane %v89, %v93
    %vm96 = vcmask 261120
    %v98 = vsel %vm96, %v83, 0
    %v101 = vsel %vm96, %v84, 0
    %103 = vmatprep.subr.mxu0 0.0
    %104 = vmatpush1.msra.mxu0 %v85
    %105 = vmatprep.subr.mxu0 0.0
    %106 = vmatpush1.msra.mxu0 %v86
    %107 = vmatprep.subr.mxu0 0.0
    %108 = vmatpush1.msra.mxu0 %v87
    %109 = vmatprep.subr.mxu0 0.0
    %110 = vmatpush1.msra.mxu0 %v88
    %111 = vmatprep.subr.mxu0 0.0
    %112 = vmatpush1.msra.mxu0 0.0
    %113 = vmatprep.subr.mxu0 0.0
    %114 = vmatpush1.msra.mxu0 0.0
    %115 = vmatprep.subr.mxu0 0.0
    %116 = vmatpush1.msra.mxu0 0.0
    %117 = vmatprep.subr.mxu0 0.0
    %118 = vmatpush1.msra.mxu0 0.0
    %119 = vmatprep.subr.mxu0 0.0
    %120 = vmatpush1.msra.mxu0 0.0
    %121 = vmatprep.subr.mxu0 0.0
    %122 = vmatpush1.msra.mxu0 0.0
    %123 = vmatprep.subr.mxu0 0.0
    %124 = vmatpush1.msra.mxu0 0.0
    %125 = vmatprep.subr.mxu0 0.0
    %126 = vmatpush1.msra.mxu0 0.0
    %127 = vmatprep.subr.mxu0 0.0
    %128 = vmatpush1.msra.mxu0 0.0
    %129 = vmatprep.subr.mxu0 0.0
    %130 = vmatpush1.msra.mxu0 0.0
    %131 = vmatprep.subr.mxu0 0.0
    %132 = vmatpush1.msra.mxu0 0.0
    %133 = vmatprep.subr.mxu0 0.0
    %134 = vmatpush1.msra.mxu0 0.0
    %135 = vmatprep.subr.mxu0 0.0
    %136 = vmatpush1.msra.mxu0 0.0
    %137 = vmatprep.subr.mxu0 0.0
    %138 = vmatpush1.msra.mxu0 0.0
    %139 = vmatprep.subr.mxu0 0.0
    %140 = vmatpush1.msra.mxu0 0.0
    %141 = vmatprep.subr.mxu0 0.0
    %142 = vmatpush1.msra.mxu0 0.0
    %143 = vmatprep.subr.mxu0 0.0
    %144 = vmatpush1.msra.mxu0 0.0
    %145 = vmatprep.subr.mxu0 0.0
    %146 = vmatpush1.msra.mxu0 0.0
    %147 = vmatprep.subr.mxu0 0.0
    %148 = vmatpush1.msra.mxu0 0.0
    %149 = vmatprep.subr.mxu0 0.0
    %150 = vmatpush1.msra.mxu0 0.0
    %151 = vmatprep.subr.mxu0 0.0
    %152 = vmatpush1.msra.mxu0 0.0
    %153 = vmatprep.subr.mxu0 0.0
    %154 = vmatpush1.msra.mxu0 0.0
    %155 = vmatprep.subr.mxu0 0.0
    %156 = vmatpush1.msra.mxu0 0.0
    %157 = vmatprep.subr.mxu0 0.0
    %158 = vmatpush1.msra.mxu0 0.0
    %159 = vmatprep.subr.mxu0 0.0
    %160 = vmatpush1.msra.mxu0 0.0
    %161 = vmatprep.subr.mxu0 0.0
    %162 = vmatpush1.msra.mxu0 0.0
    %163 = vmatprep.subr.mxu0 0.0
    %164 = vmatpush1.msra.mxu0 0.0
    %165 = vmatprep.subr.mxu0 0.0
    %166 = vmatpush1.msra.mxu0 0.0
    %167 = vmatprep.mubr.f32.mxu0 0.0
    %168 = vmatmul.mubr.f32.gmra.mrb[0].mxu0 %v98
    %v169 = vpop.f32.mrb[0].mxu0
    %v170 = vadd.f32 %v94, %v169
    %v171 = vpop.f32.mrb[0].mxu0
    %172 = vmatprep.mubr.f32.mxu0 0.0
    %173 = vmatmul.mubr.f32.gmra.mrb[0].mxu0 %v101
    %v174 = vpop.f32.mrb[0].mxu0
    %v175 = vadd.f32 %v94, %v174
    %v176 = vpop.f32.mrb[0].mxu0
    %177 = vdwg.mxu0
    %v178 = vmul.f32 %v170, 0.5
    %v179 = vmul.f32 %v175, 0.5
    %v180 = vmul.f32 %v170, 0.70710677
    %v181 = vmul.f32 %v175, 0.70710677
    %vm182 = vcmp.ge.f32.partialorder %v180, 0.0
    %vm183 = vcmp.ge.f32.partialorder %v181, 0.0
    %v184 = vsel %vm182, 1.0, -1.0
    %v185 = vsel %vm183, 1.0, -1.0
    %v186 = vand.u32 2147483647, %v180
    %v187 = vand.u32 2147483647, %v181
    %v188 = vmul.f32 %v186, 0.3275911
    %v189 = vmul.f32 %v187, 0.3275911
    %v190 = vadd.f32 %v188, 1.0
    %v191 = vadd.f32 %v189, 1.0
    %v192 = vrcp.pop %v190
    %v193 = vmul.f32 1.0, %v192
    %v194 = vrcp.pop %v191
    %v195 = vmul.f32 1.0, %v194
    %v196 = vmul.f32 %v193, 1.0614054
    %v197 = vmul.f32 %v195, 1.0614054
    %v198 = vadd.f32 %v196, -1.4531521
    %v199 = vadd.f32 %v197, -1.4531521
    %v200 = vmul.f32 %v198, %v193
    %v201 = vmul.f32 %v199, %v195
    %v202 = vadd.f32 %v200, 1.4214138
    %v203 = vadd.f32 %v201, 1.4214138
    %v204 = vmul.f32 %v202, %v193
    %v205 = vmul.f32 %v203, %v195
    %v206 = vadd.f32 %v204, -0.28449672
    %v207 = vadd.f32 %v205, -0.28449672
    %v208 = vmul.f32 %v206, %v193
    %v209 = vmul.f32 %v207, %v195
    %v210 = vadd.f32 %v208, 0.2548296
    %v211 = vadd.f32 %v209, 0.2548296
    %v212 = vmul.f32 %v210, %v193
    %v213 = vmul.f32 %v211, %v195
    %v214 = vsub.f32 0.0, %v186
    %v215 = vsub.f32 0.0, %v187
    %v216 = vmul.f32 %v214, %v186
    %v217 = vmul.f32 %v215, %v187
    %v218 = vmul.f32 %v216, 1.442695
    %v219 = vpow.pop %v218
    %v220 = vmul.f32 %v217, 1.442695
    %v221 = vpow.pop %v220
    %v222 = vmul.f32 %v212, %v219
    %v223 = vmul.f32 %v213, %v221
    %v224 = vsub.f32 1.0, %v222
    %v225 = vsub.f32 1.0, %v223
    %v226 = vmul.f32 %v184, %v224
    %v227 = vmul.f32 %v185, %v225
    %v228 = vadd.f32 %v226, 1.0
    %v229 = vadd.f32 %v227, 1.0
    %v230 = vmul.f32 %v178, %v228
    %v231 = vmul.f32 %v179, %v229
    %v232 = vsel %vm96, %v230, 0.0
    %233 = vadd.xlane.f32.xlu0 %v232
    %v234 = vpop.xlane.xlu0 %233
    %v235 = vsel %vm96, %v231, 0.0
    %236 = vadd.xlane.f32.xlu0 %v235
    %v237 = vpop.xlane.xlu0 %236
    %v238 = vrcp.pop 32.0
    %v239 = vmul.f32 %v234, %v238
    %v240 = vmul.f32 %v237, %v238
    %v241 = vsub.f32 %v230, %v239
    %v242 = vsub.f32 %v231, %v240
    %v243 = vmul.f32 %v241, %v241
    %v244 = vmul.f32 %v242, %v242
    %v245 = vsel %vm96, %v243, 0.0
    %246 = vadd.xlane.f32.xlu0 %v245
    %v247 = vpop.xlane.xlu0 %246
    %v248 = vsel %vm96, %v244, 0.0
    %249 = vadd.xlane.f32.xlu0 %v248
    %v250 = vpop.xlane.xlu0 %249
    %v251 = vmul.f32 %v247, %v238
    %v252 = vmul.f32 %v250, %v238
    %v253 = vadd.f32 %v251, 1e-12
    %v254 = vadd.f32 %v252, 1e-12
    %v255 = vrsqrt.pop %v253
    %v256 = vrsqrt.pop %v254
    %v257 = vmul.f32 %v241, %v255
    %v258 = vmul.f32 %v242, %v256
    %v259 = vld [vmem:[#allocation8] sm:$0x1]
    %v261 = vlaneseq
    %v262 = vshrl.u32 %v261, 7
    %v263 = vsub.s32 0, %v262
    %v264 = vrot.slane %v259, %v263
    %v266 = vmul.f32 %v257, %v264
    %v267 = vmul.f32 %v258, %v264
    %v268 = vld [vmem:[#allocation10] sm:$0x1]
    %v270 = vlaneseq
    %v271 = vshrl.u32 %v270, 7
    %v272 = vsub.s32 0, %v271
    %v273 = vrot.slane %v268, %v272
    %v275 = vadd.f32 %v266, %v273
    %v276 = vadd.f32 %v267, %v273
    %277 = vst.msk [vmem:[#allocation11] sm:$0xff] %vm96, %v275
    %278 = vst.msk [vmem:[#allocation11 + $0x8] sm:$0xff] %vm96, %v276
    // Predicated region
    $region42: #{tpu_custom_call.1} parent=1 // pred_check
      _
    $region43: #{tpu_custom_call.1} parent=1 // pred_check_branch
      %280 = sbr.rel (0) target = $region45
    $region44: #{tpu_custom_call.1} parent=1 // pred_region
      %s282 = ssub.s32 256, 256
      %283 = vsyncadd [#allocation4], %s282
      %s284 = sshll.u32 [#allocation11], 4
      %s285 = int_to_ptr.vmem [resolvable:$true] %s284
      %290 = dma.vmem_to_hbm [thread:$0]  %s285, 256, %s5, [#allocation4], 128, 128, 8
    $region45: #{tpu_custom_call.1} parent=1 // pred_fallthru
      _
    // Predicated region
    $region46: #{tpu_custom_call.1} parent=1 // pred_check
      _
    $region47: #{tpu_custom_call.1} parent=1 // pred_check_branch
      %292 = sbr.rel (0) target = $region49
    $region48: #{tpu_custom_call.1} parent=1 // pred_region
      %293 = dma.done [#allocation4], 256
    $region49: #{tpu_custom_call.1} parent=1 // pred_fallthru
      _
    %294 = vsyncpa [#allocation3], 1
    %295 = vsyncpa [#allocation6], 1
    %296 = vsyncpa [#allocation9], 1
    %297 = vsyncpa [#allocation4], 1

</llo_original>
